<compile_context>
chip_gen: v6e
topology: v6e:2x2x1
jax: 0.10.0
libtpu: 0.0.40
codegen_flags: <defaults>
</compile_context>

<pallas_src>
import functools

import jax
import jax.numpy as jnp
from jax.experimental import pallas as pl
from jax.experimental.pallas import tpu as pltpu

_LANE = 128
_SUB = 8
_MAX_TILE_M = 2048  # (2048, 128) f32 block = 1 MiB per input per buffer


def _l1l2_kernel(p_ref, t_ref, l1_ref, l2_ref, *, smooth_l1: bool,
                 tile_m: int, total_rows: int, need_mask: bool):
    # Upcast in VMEM (DMA moved the original dtype).
    d = p_ref[...].astype(jnp.float32) - t_ref[...].astype(jnp.float32)

    if smooth_l1:
        # F.smooth_l1_loss with default beta=1.0:
        # 0.5*d^2 if |d| < 1 else |d| - 0.5
        ad = jnp.abs(d)
        l1v = jnp.where(ad < 1.0, 0.5 * d * d, ad - 0.5)
    else:
        l1v = jnp.abs(d)
    sq = d * d

    if need_mask:
        # Last block may extend past the array (undefined padding rows):
        # zero out rows whose global index >= total_rows.
        i = pl.program_id(0)
        rows = jax.lax.broadcasted_iota(jnp.int32, d.shape, 0) + i * tile_m
        valid = rows < total_rows
        l1v = jnp.where(valid, l1v, 0.0)
        sq = jnp.where(valid, sq, 0.0)

    # Fold (tile_m, 128) -> (8, 128) with pure VPU vreg adds; the full
    # cross-lane reduction happens once, outside the kernel, on a tiny array.
    g = tile_m // _SUB
    l1_ref[...] = jnp.sum(l1v.reshape(g, _SUB, _LANE), axis=0)
    l2_ref[...] = jnp.sum(sq.reshape(g, _SUB, _LANE), axis=0)


def l1l2_loss(p, t, *, l1_weight, l2_weight, smooth_l1=False):
    """Replicates L1L2Loss.forward: mean-reduced L1 (or smooth L1) and MSE."""
    assert p.shape == t.shape, "shapes of logits and targets must match"
    n = p.size

    pf = p.reshape(-1)
    tf = t.reshape(-1)

    # Only pad when the flat size is not a multiple of one (8,128) vreg tile
    # (rare for NN shapes; padded zeros contribute 0 to both sums).
    vreg = _SUB * _LANE
    padded = pl.cdiv(n, vreg) * vreg
    if padded != n:
        pf = jnp.pad(pf, (0, padded - n))
        tf = jnp.pad(tf, (0, padded - n))

    M = padded // _LANE                      # multiple of 8
    tile_m = min(_MAX_TILE_M, M)             # multiple of 8 (or == M)
    steps = pl.cdiv(M, tile_m)
    need_mask = (M % tile_m) != 0            # ragged last block -> mask rows

    p2 = pf.reshape(M, _LANE)
    t2 = tf.reshape(M, _LANE)

    kernel = functools.partial(
        _l1l2_kernel, smooth_l1=smooth_l1, tile_m=tile_m,
        total_rows=M, need_mask=need_mask)

    l1_part, l2_part = pl.pallas_call(
        kernel,
        out_shape=(
            jax.ShapeDtypeStruct((steps * _SUB, _LANE), jnp.float32),
            jax.ShapeDtypeStruct((steps * _SUB, _LANE), jnp.float32),
        ),
        grid_spec=pltpu.PrefetchScalarGridSpec(
            num_scalar_prefetch=0,
            grid=(steps,),
            in_specs=[
                pl.BlockSpec((tile_m, _LANE), lambda i: (i, 0)),
                pl.BlockSpec((tile_m, _LANE), lambda i: (i, 0)),
            ],
            out_specs=[
                pl.BlockSpec((_SUB, _LANE), lambda i: (i, 0)),
                pl.BlockSpec((_SUB, _LANE), lambda i: (i, 0)),
            ],
        ),
        compiler_params=pltpu.CompilerParams(
            dimension_semantics=("parallel",)   # independent per-step partials
        ),
    )(p2, t2)

    inv_n = jnp.float32(1.0) / jnp.float32(n)
    l1_loss = jnp.sum(l1_part) * inv_n
    l2_loss = jnp.sum(l2_part) * inv_n
    loss = l1_loss * jnp.float32(l1_weight) + l2_loss * jnp.float32(l2_weight)
    return {"l1_loss": l1_loss, "l2_loss": l2_loss, "loss": loss}


def _ref_losses(p, t, smooth_l1):
    d = p.astype(jnp.float32) - t.astype(jnp.float32)
    if smooth_l1:
        ad = jnp.abs(d)
        l1 = jnp.mean(jnp.where(ad < 1.0, 0.5 * d * d, ad - 0.5))
    else:
        l1 = jnp.mean(jnp.abs(d))
    l2 = jnp.mean(d * d)
    return l1, l2


if __name__ == "__main__":
    key = jax.random.PRNGKey(0)

    # --- Test 1: plain L1 + MSE, small shape, single grid step ---
    params = {"l1_weight": 0.7, "l2_weight": 0.3, "smooth_l1": False}
    k1, k2, k3, k4 = jax.random.split(key, 4)
    x_shape = (2, 4, 16, 16)
    logits = jax.random.normal(k1, x_shape, dtype=jnp.float32)
    y = jax.random.normal(k2, x_shape, dtype=jnp.float32)

    out = l1l2_loss(logits, y,
                    l1_weight=params["l1_weight"],
                    l2_weight=params["l2_weight"],
                    smooth_l1=params["smooth_l1"])
    jax.block_until_ready(out["loss"])

    ref_l1, ref_l2 = _ref_losses(logits, y, params["smooth_l1"])
    ref_loss = ref_l1 * params["l1_weight"] + ref_l2 * params["l2_weight"]
    assert jnp.allclose(out["l1_loss"], ref_l1, rtol=1e-5, atol=1e-6)
    assert jnp.allclose(out["l2_loss"], ref_l2, rtol=1e-5, atol=1e-6)
    assert jnp.allclose(out["loss"], ref_loss, rtol=1e-5, atol=1e-6)

    # --- Test 2: smooth L1, multi-step grid with ragged last block (mask path) ---
    params2 = {"l1_weight": 0.4, "l2_weight": 0.6, "smooth_l1": True}
    x_shape2 = (4, 64, 32, 40)   # 327680 elems -> 2560 rows, tile_m=2048, 2 steps
    logits2 = jax.random.normal(k3, x_shape2, dtype=jnp.float32)
    y2 = jax.random.normal(k4, x_shape2, dtype=jnp.float32)

    out2 = l1l2_loss(logits2, y2,
                     l1_weight=params2["l1_weight"],
                     l2_weight=params2["l2_weight"],
                     smooth_l1=params2["smooth_l1"])
    jax.block_until_ready(out2["loss"])

    ref2_l1, ref2_l2 = _ref_losses(logits2, y2, params2["smooth_l1"])
    ref2_loss = ref2_l1 * params2["l1_weight"] + ref2_l2 * params2["l2_weight"]
    assert jnp.allclose(out2["l1_loss"], ref2_l1, rtol=1e-4, atol=1e-6)
    assert jnp.allclose(out2["l2_loss"], ref2_l2, rtol=1e-4, atol=1e-6)
    assert jnp.allclose(out2["loss"], ref2_loss, rtol=1e-4, atol=1e-6)

    print("KERNEL_OK")
</pallas_src>

<mosaic_0001>
module attributes {stable_mosaic.version = 11 : i64} {
  func.func @_l1l2_kernel(%arg0: i32, %arg1: memref<16x128xf32, #tpu.memory_space<vmem>>, %arg2: memref<16x128xf32, #tpu.memory_space<vmem>>, %arg3: memref<8x128xf32, #tpu.memory_space<vmem>>, %arg4: memref<8x128xf32, #tpu.memory_space<vmem>>) attributes {dimension_semantics = [#tpu.dimension_semantics<parallel>], iteration_bounds = array<i64: 1>, scalar_prefetch = 0 : i64, scratch_operands = 0 : i64, tpu.core_type = #tpu.core_type<tc>, window_params = [{transform_indices = @transform_0, window_bounds = array<i64: 16, 128>}, {transform_indices = @transform_1, window_bounds = array<i64: 16, 128>}, {transform_indices = @transform_2, window_bounds = array<i64: 8, 128>}, {transform_indices = @transform_3, window_bounds = array<i64: 8, 128>}]} {
    %c0 = arith.constant 0 : index
    %c0_0 = arith.constant 0 : index
    %0 = vector.load %arg1[%c0, %c0_0] : memref<16x128xf32, #tpu.memory_space<vmem>>, vector<16x128xf32>
    %c0_1 = arith.constant 0 : index
    %c0_2 = arith.constant 0 : index
    %1 = vector.load %arg2[%c0_1, %c0_2] : memref<16x128xf32, #tpu.memory_space<vmem>>, vector<16x128xf32>
    %2 = arith.subf %0, %1 : vector<16x128xf32>
    %3 = math.absf %2 : vector<16x128xf32>
    %4 = arith.mulf %2, %2 : vector<16x128xf32>
    %5 = vector.shape_cast %3 : vector<16x128xf32> to vector<2x8x128xf32>
    %cst = arith.constant dense<0.000000e+00> : vector<8x128xf32>
    %6 = vector.multi_reduction <add>, %5, %cst [0] : vector<2x8x128xf32> to vector<8x128xf32>
    %c0_3 = arith.constant 0 : index
    %c0_4 = arith.constant 0 : index
    %7 = vector.load %arg3[%c0_3, %c0_4] : memref<8x128xf32, #tpu.memory_space<vmem>>, vector<8x128xf32>
    tpu.vector_store %arg3[%c0_3, %c0_4], %6 {strides = array<i32>} : memref<8x128xf32, #tpu.memory_space<vmem>>, vector<8x128xf32>,
    %8 = vector.shape_cast %4 : vector<16x128xf32> to vector<2x8x128xf32>
    %cst_5 = arith.constant dense<0.000000e+00> : vector<8x128xf32>
    %9 = vector.multi_reduction <add>, %8, %cst_5 [0] : vector<2x8x128xf32> to vector<8x128xf32>
    %c0_6 = arith.constant 0 : index
    %c0_7 = arith.constant 0 : index
    %10 = vector.load %arg4[%c0_6, %c0_7] : memref<8x128xf32, #tpu.memory_space<vmem>>, vector<8x128xf32>
    tpu.vector_store %arg4[%c0_6, %c0_7], %9 {strides = array<i32>} : memref<8x128xf32, #tpu.memory_space<vmem>>, vector<8x128xf32>,
    return
  }
  func.func @transform_0(%arg0: i32) -> (i32, i32) {
    %c0_i32 = arith.constant 0 : i32
    %c0_i32_0 = arith.constant 0 : i32
    return %arg0, %c0_i32 : i32, i32
  }
  func.func @transform_1(%arg0: i32) -> (i32, i32) {
    %c0_i32 = arith.constant 0 : i32
    %c0_i32_0 = arith.constant 0 : i32
    return %arg0, %c0_i32 : i32, i32
  }
  func.func @transform_2(%arg0: i32) -> (i32, i32) {
    %c0_i32 = arith.constant 0 : i32
    %c0_i32_0 = arith.constant 0 : i32
    return %arg0, %c0_i32 : i32, i32
  }
  func.func @transform_3(%arg0: i32) -> (i32, i32) {
    %c0_i32 = arith.constant 0 : i32
    %c0_i32_0 = arith.constant 0 : i32
    return %arg0, %c0_i32 : i32, i32
  }
}

</mosaic_0001>

<llo_original>
// kernel: tpu_custom_call.1
$region0: #{tpu_custom_call.1}
  #allocation0 [shape = 'u32[]', space=smem, size = 0x4, offset = 0x4, fixed_abs, tag = 'smem constant byte address 0x4 - core index']
  #allocation1 [shape = 'u32[144,128]{1,0:T(1,128)}', space=vmem, size = 0x12000, scoped, tag = 'internal scratch']
  %s0 = inlined_call_operand.hbm [shape: f32[16,128], index: 0, kind: input, shape index: {}]
  %s1 = inlined_call_operand.hbm [shape: f32[16,128], index: 1, kind: input, shape index: {}]
  %s2 = inlined_call_operand.hbm [shape: f32[8,128], index: 2, kind: output, shape index: {0}]
  %s3 = inlined_call_operand.hbm [shape: f32[8,128], index: 3, kind: output, shape index: {1}]
  %4 = xla_tuple %s2, %s3
  %s5 = sld [smem:[#allocation0]]
  $region34: #{tpu_custom_call.1} parent=0
    _
  %s7 = ssub.s32 1, %s5
  %s8 = scalar_select 0, %s7, %s5
  $region1: #{tpu_custom_call.1} parent=0
    #allocation2 [shape = 'u8[8192]{0}', space=vmem, size = 0x2000, scoped, tag = 'input window, operand 0, single buffered']
    #allocation3 [shape = 's32[1]{0}', space=sflag, size = 0x4, scoped, tag = 'scoped memory for tpu_custom_call.1']
    #allocation4 [shape = 's32[1]{0}', space=sflag, size = 0x4, scoped, tag = 'scoped memory for tpu_custom_call.1']
    #allocation5 [shape = 'u8[8192]{0}', space=vmem, size = 0x2000, scoped, tag = 'input window, operand 1, single buffered']
    #allocation6 [shape = 's32[1]{0}', space=sflag, size = 0x4, scoped, tag = 'scoped memory for tpu_custom_call.1']
    #allocation7 [shape = 'u8[4096]{0}', space=vmem, size = 0x1000, scoped, tag = 'output window, operand 0, single buffered']
    #allocation8 [shape = 'u8[4096]{0}', space=vmem, size = 0x1000, scoped, tag = 'output window, operand 1, single buffered']
    #allocation9 [shape = 's32[1]{0}', space=sflag, size = 0x4, scoped, tag = 'scoped memory for tpu_custom_call.1']
    %9 = vsyncpa [#allocation3], 0
    %10 = vsyncpa [#allocation6], 0
    %11 = vsyncpa [#allocation4], 0
    %12 = vsyncpa [#allocation9], 0
    // Predicated region
    $region2: #{tpu_custom_call.1} parent=1 // pred_check
      _
    $region3: #{tpu_custom_call.1} parent=1 // pred_check_branch
      %14 = sbr.rel (0) target = $region5
    $region4: #{tpu_custom_call.1} parent=1 // pred_region
      %s16 = ssub.s32 256, 256
      %17 = vsyncadd [#allocation3], %s16
      %s18 = sshll.u32 [#allocation2], 4
      %s19 = int_to_ptr.vmem [resolvable:$true] %s18
      %24 = dma.hbm_to_vmem [thread:$0]  %s0, 256, %s19, [#allocation3], 128, 128, 8
    $region5: #{tpu_custom_call.1} parent=1 // pred_fallthru
      _
    // Predicated region
    $region6: #{tpu_custom_call.1} parent=1 // pred_check
      _
    $region7: #{tpu_custom_call.1} parent=1 // pred_check_branch
      %26 = sbr.rel (0) target = $region9
    $region8: #{tpu_custom_call.1} parent=1 // pred_region
      %s28 = ssub.s32 256, 256
      %29 = vsyncadd [#allocation6], %s28
      %s30 = sshll.u32 [#allocation5], 4
      %s31 = int_to_ptr.vmem [resolvable:$true] %s30
      %36 = dma.hbm_to_vmem [thread:$0]  %s1, 256, %s31, [#allocation6], 128, 128, 8
    $region9: #{tpu_custom_call.1} parent=1 // pred_fallthru
      _
    // Predicated region
    $region10: #{tpu_custom_call.1} parent=1 // pred_check
      _
    $region11: #{tpu_custom_call.1} parent=1 // pred_check_branch
      %38 = sbr.rel (0) target = $region13
    $region12: #{tpu_custom_call.1} parent=1 // pred_region
      %39 = dma.done [#allocation3], 256
    $region13: #{tpu_custom_call.1} parent=1 // pred_fallthru
      _
    // Predicated region
    $region14: #{tpu_custom_call.1} parent=1 // pred_check
      _
    $region15: #{tpu_custom_call.1} parent=1 // pred_check_branch
      %41 = sbr.rel (0) target = $region17
    $region16: #{tpu_custom_call.1} parent=1 // pred_region
      %42 = dma.done [#allocation6], 256
    $region17: #{tpu_custom_call.1} parent=1 // pred_fallthru
      _
    %v43 = vld [vmem:[#allocation2] sm:$0xff]
    %v44 = vld [vmem:[#allocation2 + $0x8] sm:$0xff]
    %v45 = vld [vmem:[#allocation5] sm:$0xff]
    %v46 = vld [vmem:[#allocation5 + $0x8] sm:$0xff]
    %v47 = vsub.f32 %v43, %v45
    %v48 = vsub.f32 %v44, %v46
    %v49 = vand.u32 2147483647, %v47
    %v50 = vand.u32 2147483647, %v48
    %v51 = vmul.f32 %v47, %v47
    %v52 = vmul.f32 %v48, %v48
    %v53 = vadd.f32 %v49, %v50
    %54 = vst [vmem:[#allocation7] sm:$0xff] %v53
    %v55 = vadd.f32 %v51, %v52
    %56 = vst [vmem:[#allocation8] sm:$0xff] %v55
    // Predicated region
    $region18: #{tpu_custom_call.1} parent=1 // pred_check
      _
    $region19: #{tpu_custom_call.1} parent=1 // pred_check_branch
      %58 = sbr.rel (0) target = $region21
    $region20: #{tpu_custom_call.1} parent=1 // pred_region
      %s60 = ssub.s32 128, 128
      %61 = vsyncadd [#allocation4], %s60
      %s63 = sshll.u32 [#allocation7], 4
      %s64 = int_to_ptr.vmem [resolvable:$true] %s63
      %66 = dma.vmem_to_hbm [thread:$0]  %s64, 128, %s2, [#allocation4]
    $region21: #{tpu_custom_call.1} parent=1 // pred_fallthru
      _
    // Predicated region
    $region22: #{tpu_custom_call.1} parent=1 // pred_check
      _
    $region23: #{tpu_custom_call.1} parent=1 // pred_check_branch
      %68 = sbr.rel (0) target = $region25
    $region24: #{tpu_custom_call.1} parent=1 // pred_region
      %s70 = ssub.s32 128, 128
      %71 = vsyncadd [#allocation9], %s70
      %s73 = sshll.u32 [#allocation8], 4
      %s74 = int_to_ptr.vmem [resolvable:$true] %s73
      %76 = dma.vmem_to_hbm [thread:$0]  %s74, 128, %s3, [#allocation9]
    $region25: #{tpu_custom_call.1} parent=1 // pred_fallthru
      _
    // Predicated region
    $region26: #{tpu_custom_call.1} parent=1 // pred_check
      _
    $region27: #{tpu_custom_call.1} parent=1 // pred_check_branch
      %78 = sbr.rel (0) target = $region29
    $region28: #{tpu_custom_call.1} parent=1 // pred_region
      %79 = dma.done [#allocation4], 128
    $region29: #{tpu_custom_call.1} parent=1 // pred_fallthru
      _
    // Predicated region
    $region30: #{tpu_custom_call.1} parent=1 // pred_check
      _
    $region31: #{tpu_custom_call.1} parent=1 // pred_check_branch
      %81 = sbr.rel (0) target = $region33
    $region32: #{tpu_custom_call.1} parent=1 // pred_region
      %82 = dma.done [#allocation9], 128
    $region33: #{tpu_custom_call.1} parent=1 // pred_fallthru
      _
    %83 = vsyncpa [#allocation3], 1
    %84 = vsyncpa [#allocation6], 1
    %85 = vsyncpa [#allocation4], 1
    %86 = vsyncpa [#allocation9], 1

</llo_original>
